<compile_context>
chip_gen: v5e
topology: v5e:2x2
jax: 0.10.0
libtpu: 0.0.40
codegen_flags: <defaults>
</compile_context>

<pallas_src>
import functools

import jax
import jax.numpy as jnp
from jax.experimental import pallas as pl
from jax.experimental.pallas import tpu as pltpu


def _round_up(x, m):
    return ((x + m - 1) // m) * m


def _studentt_kernel(x_ref, w_ref, b_ref, mu_ref, sigma_ref, nu_ref, *, c_out):
    x = x_ref[...]

    # One fused MXU matmul for all three heads: [TB, C_IN] @ [C_IN, 3*C_OUT]
    # laid out as (mu | sigma | nu) columns.
    pre = jnp.dot(x, w_ref[...], preferred_element_type=jnp.float32) + b_ref[...]

    # mu is the raw affine output.
    mu_ref[...] = pre[:, :c_out].astype(mu_ref.dtype)

    # Softplus (PyTorch beta=1, threshold=20) only on the sigma/nu columns —
    # one EUP exp + one EUP log1p per element; overflow guarded in the
    # untaken branch.  (Note: OOB rows of a ragged last batch block may hold
    # garbage; exp() there can be inf/NaN but those rows are masked on store.
    # Do not add any cross-row reduction to this kernel.)
    pre_sn = pre[:, c_out:]
    big = pre_sn > 20.0
    sp = jnp.where(big, pre_sn, jnp.log1p(jnp.exp(jnp.where(big, 0.0, pre_sn))))

    sigma_ref[...] = sp[:, :c_out].astype(sigma_ref.dtype)
    nu_ref[...] = (sp[:, c_out:] + 1.0).astype(nu_ref.dtype)


@functools.partial(jax.jit, static_argnames=("tb",))
def studentt_head(x, w_mu, b_mu, w_s, b_s, w_n, b_n, *, tb=8192):
    B, C_IN = x.shape
    C_OUT = w_mu.shape[1]
    C3 = 3 * C_OUT

    # One-time concat in XLA (outside the kernel).
    w_cat = jnp.concatenate([w_mu, w_s, w_n], axis=1)   # [C_IN, 3*C_OUT]
    b_cat = jnp.concatenate([b_mu, b_s, b_n], axis=1)   # [1,    3*C_OUT]

    # VMEM capacity of the actual chip (trace-time query); fall back to the
    # most restrictive per-core figure (v7x: 64 MiB) if unavailable.
    try:
        vmem_cap = int(pltpu.get_tpu_info().vmem_capacity_bytes)
    except Exception:
        vmem_cap = 64 << 20
    vmem_budget = (vmem_cap * 3) // 4          # ~96 MiB on v5e/v6e, ~48 MiB on v7x

    def working_set(tb_rows):
        # 2x everything: Pallas double-buffers even constant-index-map inputs.
        return 4 * (2 * tb_rows * C_IN      # X tile
                    + 2 * C_IN * C3         # resident (but double-buffered) W_cat
                    + 2 * C3                # b_cat
                    + 2 * tb_rows * C3      # three output tiles combined
                    ) + (2 << 20)           # slack

    # Batch tile: as large as requested (rows are only a few hundred bytes, so
    # big tiles amortize the ~0.35 us per-grid-step overhead), multiple of 8,
    # shrunk if the double-buffered working set would overflow VMEM.
    tb_eff = min(tb, _round_up(B, 8))
    while working_set(tb_eff) > vmem_budget and tb_eff > 512:
        tb_eff = max(512, tb_eff // 2)
    # TODO(synk): if 2*W_cat alone approaches the VMEM budget (production-size
    # heads on v7x), add a second grid axis over 3*C_OUT so W streams instead
    # of staying resident.
    nb = pl.cdiv(B, tb_eff)                    # ragged last block is masked

    vmem_limit = int(min(max(working_set(tb_eff), 16 << 20), vmem_budget))

    cost = pl.CostEstimate(
        flops=2 * B * C_IN * C3,
        transcendentals=2 * B * 2 * C_OUT,
        bytes_accessed=4 * (B * C_IN + C_IN * C3 + C3 + 3 * B * C_OUT),
    )

    out_sds = jax.ShapeDtypeStruct((B, C_OUT), jnp.float32)
    out_spec = pl.BlockSpec((tb_eff, C_OUT), lambda i: (i, 0))

    # TODO(synk): optional bf16 X/W_cat (keep preferred_element_type=f32) would
    # roughly halve input HBM bytes; kept f32 here to match PyTorch numerics.
    mu, sigma, nu = pl.pallas_call(
        functools.partial(_studentt_kernel, c_out=C_OUT),
        out_shape=(out_sds, out_sds, out_sds),
        grid=(nb,),
        in_specs=[
            pl.BlockSpec((tb_eff, C_IN), lambda i: (i, 0)),   # X: streamed over batch
            pl.BlockSpec((C_IN, C3), lambda i: (0, 0)),       # W_cat: VMEM-resident
            pl.BlockSpec((1, C3), lambda i: (0, 0)),          # b_cat: VMEM-resident
        ],
        out_specs=(out_spec, out_spec, out_spec),
        compiler_params=pltpu.CompilerParams(
            # TODO(synk): on v7x verify "parallel" shards the batch axis across
            # both TensorCores; if not, switch this axis to pltpu.CORE_PARALLEL.
            dimension_semantics=("parallel",),
            vmem_limit_bytes=vmem_limit,
        ),
        cost_estimate=cost,
    )(x, w_cat, b_cat)

    return mu, sigma, nu


def init_params(key, c_in, c_out):
    # Deterministic init mimicking PyTorch nn.Linear default:
    # U(-1/sqrt(c_in), +1/sqrt(c_in)). Weights stored pre-transposed [c_in, c_out].
    bound = 1.0 / jnp.sqrt(float(c_in))
    ks = jax.random.split(key, 6)
    u = lambda k, shape: jax.random.uniform(k, shape, jnp.float32, -bound, bound)
    w_mu = u(ks[0], (c_in, c_out)); b_mu = u(ks[1], (1, c_out))
    w_s = u(ks[2], (c_in, c_out)); b_s = u(ks[3], (1, c_out))
    w_n = u(ks[4], (c_in, c_out)); b_n = u(ks[5], (1, c_out))
    return w_mu, b_mu, w_s, b_s, w_n, b_n


if __name__ == "__main__":
    key = jax.random.PRNGKey(0)
    k_x, k_p = jax.random.split(key)

    B, C_IN, C_OUT = 64, 32, 16
    x = jax.random.normal(k_x, (B, C_IN), jnp.float32)
    params = init_params(k_p, C_IN, C_OUT)

    mu, sigma, nu = studentt_head(x, *params)
    jax.block_until_ready((mu, sigma, nu))

    # Reference check in plain JAX.
    w_mu, b_mu, w_s, b_s, w_n, b_n = params
    ref_mu = x @ w_mu + b_mu
    ref_sigma = jax.nn.softplus(x @ w_s + b_s)
    ref_nu = jax.nn.softplus(x @ w_n + b_n) + 1.0
    assert mu.shape == (B, C_OUT) and sigma.shape == (B, C_OUT) and nu.shape == (B, C_OUT)
    assert jnp.allclose(mu, ref_mu, atol=1e-5)
    assert jnp.allclose(sigma, ref_sigma, atol=1e-5)
    assert jnp.allclose(nu, ref_nu, atol=1e-5)
    assert bool(jnp.all(sigma > 0)) and bool(jnp.all(nu > 1))

    print("KERNEL_OK")
</pallas_src>

<mosaic_0001>
module attributes {stable_mosaic.version = 11 : i64} {
  func.func @_studentt_kernel(%arg0: i32, %arg1: memref<64x32xf32, #tpu.memory_space<vmem>>, %arg2: memref<32x48xf32, #tpu.memory_space<vmem>>, %arg3: memref<1x48xf32, #tpu.memory_space<vmem>>, %arg4: memref<64x16xf32, #tpu.memory_space<vmem>>, %arg5: memref<64x16xf32, #tpu.memory_space<vmem>>, %arg6: memref<64x16xf32, #tpu.memory_space<vmem>>) attributes {dimension_semantics = [#tpu.dimension_semantics<parallel>], iteration_bounds = array<i64: 1>, scalar_prefetch = 0 : i64, scratch_operands = 0 : i64, tpu.core_type = #tpu.core_type<tc>, window_params = [{transform_indices = @transform_0, window_bounds = array<i64: 64, 32>}, {pipeline_mode = #tpu.pipeline_mode<synchronous>, transform_indices = @transform_1, window_bounds = array<i64: 32, 48>}, {pipeline_mode = #tpu.pipeline_mode<synchronous>, transform_indices = @transform_2, window_bounds = array<i64: 1, 48>}, {transform_indices = @transform_3, window_bounds = array<i64: 64, 16>}, {transform_indices = @transform_4, window_bounds = array<i64: 64, 16>}, {transform_indices = @transform_5, window_bounds = array<i64: 64, 16>}]} {
    %c0 = arith.constant 0 : index
    %c0_0 = arith.constant 0 : index
    %0 = vector.load %arg1[%c0, %c0_0] : memref<64x32xf32, #tpu.memory_space<vmem>>, vector<64x32xf32>
    %c0_1 = arith.constant 0 : index
    %c0_2 = arith.constant 0 : index
    %1 = vector.load %arg2[%c0_1, %c0_2] : memref<32x48xf32, #tpu.memory_space<vmem>>, vector<32x48xf32>
    %cst = arith.constant dense<0.000000e+00> : vector<64x48xf32>
    %2 = tpu.matmul %0, %1, %cst {dimension_numbers = #tpu.dot_dimension_numbers<[1], [0], [0], [1], [0, 0, 1, 1], [], []>} : vector<64x32xf32>, vector<32x48xf32>, vector<64x48xf32> -> vector<64x48xf32>
    %c0_3 = arith.constant 0 : index
    %c0_4 = arith.constant 0 : index
    %3 = vector.load %arg3[%c0_3, %c0_4] : memref<1x48xf32, #tpu.memory_space<vmem>>, vector<1x48xf32>
    %4 = vector.broadcast %3 : vector<1x48xf32> to vector<64x48xf32>
    %5 = arith.addf %2, %4 : vector<64x48xf32>
    %6 = vector.extract_strided_slice %5 {offsets = [0, 0], sizes = [64, 16], strides = [1, 1]} : vector<64x48xf32> to vector<64x16xf32>
    %c0_5 = arith.constant 0 : index
    %c0_6 = arith.constant 0 : index
    %7 = vector.load %arg4[%c0_5, %c0_6] : memref<64x16xf32, #tpu.memory_space<vmem>>, vector<64x16xf32>
    tpu.vector_store %arg4[%c0_5, %c0_6], %6 {strides = array<i32>} : memref<64x16xf32, #tpu.memory_space<vmem>>, vector<64x16xf32>,
    %8 = vector.extract_strided_slice %5 {offsets = [0, 16], sizes = [64, 32], strides = [1, 1]} : vector<64x48xf32> to vector<64x32xf32>
    %cst_7 = arith.constant 2.000000e+01 : f32
    %9 = vector.broadcast %cst_7 : f32 to vector<64x32xf32>
    %10 = arith.cmpf ogt, %8, %9 : vector<64x32xf32>
    %cst_8 = arith.constant 0.000000e+00 : f32
    %11 = vector.broadcast %cst_8 : f32 to vector<64x32xf32>
    %12 = arith.select %10, %11, %8 : vector<64x32xi1>, vector<64x32xf32>
    %13 = math.exp %12 : vector<64x32xf32>
    %14 = math.log1p %13 : vector<64x32xf32>
    %15 = arith.select %10, %8, %14 : vector<64x32xi1>, vector<64x32xf32>
    %16 = vector.extract_strided_slice %15 {offsets = [0, 0], sizes = [64, 16], strides = [1, 1]} : vector<64x32xf32> to vector<64x16xf32>
    %c0_9 = arith.constant 0 : index
    %c0_10 = arith.constant 0 : index
    %17 = vector.load %arg5[%c0_9, %c0_10] : memref<64x16xf32, #tpu.memory_space<vmem>>, vector<64x16xf32>
    tpu.vector_store %arg5[%c0_9, %c0_10], %16 {strides = array<i32>} : memref<64x16xf32, #tpu.memory_space<vmem>>, vector<64x16xf32>,
    %18 = vector.extract_strided_slice %15 {offsets = [0, 16], sizes = [64, 16], strides = [1, 1]} : vector<64x32xf32> to vector<64x16xf32>
    %cst_11 = arith.constant 1.000000e+00 : f32
    %19 = vector.broadcast %cst_11 : f32 to vector<64x16xf32>
    %20 = arith.addf %18, %19 : vector<64x16xf32>
    %c0_12 = arith.constant 0 : index
    %c0_13 = arith.constant 0 : index
    %21 = vector.load %arg6[%c0_12, %c0_13] : memref<64x16xf32, #tpu.memory_space<vmem>>, vector<64x16xf32>
    tpu.vector_store %arg6[%c0_12, %c0_13], %20 {strides = array<i32>} : memref<64x16xf32, #tpu.memory_space<vmem>>, vector<64x16xf32>,
    return
  }
  func.func @transform_0(%arg0: i32) -> (i32, i32) {
    %c0_i32 = arith.constant 0 : i32
    %c0_i32_0 = arith.constant 0 : i32
    return %arg0, %c0_i32 : i32, i32
  }
  func.func @transform_1(%arg0: i32) -> (i32, i32) {
    %c0_i32 = arith.constant 0 : i32
    %c0_i32_0 = arith.constant 0 : i32
    %c0_i32_1 = arith.constant 0 : i32
    return %c0_i32, %c0_i32_0 : i32, i32
  }
  func.func @transform_2(%arg0: i32) -> (i32, i32) {
    %c0_i32 = arith.constant 0 : i32
    %c0_i32_0 = arith.constant 0 : i32
    %c0_i32_1 = arith.constant 0 : i32
    return %c0_i32, %c0_i32_0 : i32, i32
  }
  func.func @transform_3(%arg0: i32) -> (i32, i32) {
    %c0_i32 = arith.constant 0 : i32
    %c0_i32_0 = arith.constant 0 : i32
    return %arg0, %c0_i32 : i32, i32
  }
  func.func @transform_4(%arg0: i32) -> (i32, i32) {
    %c0_i32 = arith.constant 0 : i32
    %c0_i32_0 = arith.constant 0 : i32
    return %arg0, %c0_i32 : i32, i32
  }
  func.func @transform_5(%arg0: i32) -> (i32, i32) {
    %c0_i32 = arith.constant 0 : i32
    %c0_i32_0 = arith.constant 0 : i32
    return %arg0, %c0_i32 : i32, i32
  }
}

</mosaic_0001>

<llo_original>
// kernel: studentt_head.1
$region0: #{studentt_head.1}
  #allocation0 [shape = 'u32[]', space=smem, size = 0x4, offset = 0x4, fixed_abs, tag = 'smem constant byte address 0x4 - core index']
  #allocation1 [shape = 'u32[72,128]{1,0:T(1,128)}', space=vmem, size = 0x9000, scoped, tag = 'internal scratch']
  %s0 = inlined_call_operand.vmem [shape: f32[64,32], index: 0, kind: input, shape index: {}]
  %s1 = inlined_call_operand.vmem [shape: f32[32,48], index: 1, kind: input, shape index: {}]
  %s2 = inlined_call_operand.vmem [shape: f32[1,48], index: 2, kind: input, shape index: {}]
  %s3 = inlined_call_operand.vmem [shape: f32[64,16], index: 3, kind: output, shape index: {0}]
  %s4 = inlined_call_operand.vmem [shape: f32[64,16], index: 4, kind: output, shape index: {1}]
  %s5 = inlined_call_operand.vmem [shape: f32[64,16], index: 5, kind: output, shape index: {2}]
  %6 = xla_tuple %s3, %s4, %s5
  %s7 = sld [smem:[#allocation0]]
  $region38: #{studentt_head.1} parent=0
    _
  %s9 = ssub.s32 1, %s7
  %s10 = scalar_select 0, %s9, %s7
  // Predicated region
  $region2: #{studentt_head.1} parent=0 // pred_check
    _
  $region3: #{studentt_head.1} parent=0 // pred_check_branch
    %12 = sbr.rel (0) target = $region5
  $region4: #{studentt_head.1} parent=0 // pred_region
    _
  $region5: #{studentt_head.1} parent=0 // pred_fallthru
    _
  // Predicated region
  $region6: #{studentt_head.1} parent=0 // pred_check
    _
  $region7: #{studentt_head.1} parent=0 // pred_check_branch
    %14 = sbr.rel (0) target = $region9
  $region8: #{studentt_head.1} parent=0 // pred_region
    _
  $region9: #{studentt_head.1} parent=0 // pred_fallthru
    _
  // Predicated region
  $region10: #{studentt_head.1} parent=0 // pred_check
    _
  $region11: #{studentt_head.1} parent=0 // pred_check_branch
    %16 = sbr.rel (0) target = $region13
  $region12: #{studentt_head.1} parent=0 // pred_region
    _
  $region13: #{studentt_head.1} parent=0 // pred_fallthru
    _
  %v17 = vld [vmem:[%s0] sm:$0xff]
  %v18 = vld [vmem:[%s0 + $0x8] sm:$0xff]
  %v19 = vld [vmem:[%s0 + $0x10] sm:$0xff]
  %v20 = vld [vmem:[%s0 + $0x18] sm:$0xff]
  %v21 = vld [vmem:[%s0 + $0x20] sm:$0xff]
  %v22 = vld [vmem:[%s0 + $0x28] sm:$0xff]
  %v23 = vld [vmem:[%s0 + $0x30] sm:$0xff]
  %v24 = vld [vmem:[%s0 + $0x38] sm:$0xff]
  %v25 = vld [vmem:[%s1] sm:$0xff]
  %v26 = vld [vmem:[%s1 + $0x8] sm:$0xff]
  %v27 = vld [vmem:[%s1 + $0x10] sm:$0xff]
  %v28 = vld [vmem:[%s1 + $0x18] sm:$0xff]
  %v29 = vld [vmem:[%s2] sm:$0x1]
  %v31 = vperm.slane %v29, 0
  %vm33 = vcmask 261120
  %v35 = vsel %vm33, %v17, 0
  %v38 = vsel %vm33, %v18, 0
  %v41 = vsel %vm33, %v19, 0
  %v44 = vsel %vm33, %v20, 0
  %v47 = vsel %vm33, %v21, 0
  %v50 = vsel %vm33, %v22, 0
  %v53 = vsel %vm33, %v23, 0
  %v56 = vsel %vm33, %v24, 0
  %58 = vmatpush.msra.mxu0 0.0
  %59 = vmatpush.msra.mxu0 0.0
  %60 = vmatpush.msra.mxu0 0.0
  %61 = vmatpush.msra.mxu0 0.0
  %62 = vmatpush.msra.mxu0 0.0
  %63 = vmatpush.msra.mxu0 0.0
  %64 = vmatpush.msra.mxu0 0.0
  %65 = vmatpush.msra.mxu0 0.0
  %66 = vmatpush.msra.mxu0 0.0
  %67 = vmatpush.msra.mxu0 0.0
  %68 = vmatpush.msra.mxu0 0.0
  %69 = vmatpush.msra.mxu0 0.0
  %70 = vmatpush.msra.mxu0 %v28
  %71 = vmatpush.msra.mxu0 %v27
  %72 = vmatpush.msra.mxu0 %v26
  %73 = vmatpush.msra.mxu0 %v25
  %74 = vmatmul.f32.gmra.mxu0 %v35
  %v75 = vpop.f32.mrf.mxu0
  %v76 = vadd.f32 %v31, %v75
  %77 = vmatmul.f32.gmra.mxu0 %v38
  %v78 = vpop.f32.mrf.mxu0
  %v79 = vadd.f32 %v31, %v78
  %80 = vmatmul.f32.gmra.mxu0 %v41
  %v81 = vpop.f32.mrf.mxu0
  %v82 = vadd.f32 %v31, %v81
  %83 = vmatmul.f32.gmra.mxu0 %v44
  %v84 = vpop.f32.mrf.mxu0
  %v85 = vadd.f32 %v31, %v84
  %86 = vmatmul.f32.gmra.mxu0 %v47
  %v87 = vpop.f32.mrf.mxu0
  %v88 = vadd.f32 %v31, %v87
  %89 = vmatmul.f32.gmra.mxu0 %v50
  %v90 = vpop.f32.mrf.mxu0
  %v91 = vadd.f32 %v31, %v90
  %92 = vmatmul.f32.gmra.mxu0 %v53
  %v93 = vpop.f32.mrf.mxu0
  %v94 = vadd.f32 %v31, %v93
  %95 = vmatmul.f32.gmra.mxu0 %v56
  %v96 = vpop.f32.mrf.mxu0
  %v97 = vadd.f32 %v31, %v96
  %98 = vdwg.mxu0
  %vm99 = vcmask 130048
  %100 = vst.msk [vmem:[%s3] sm:$0xff] %vm99, %v76
  %101 = vst.msk [vmem:[%s3 + $0x8] sm:$0xff] %vm99, %v79
  %102 = vst.msk [vmem:[%s3 + $0x10] sm:$0xff] %vm99, %v82
  %103 = vst.msk [vmem:[%s3 + $0x18] sm:$0xff] %vm99, %v85
  %104 = vst.msk [vmem:[%s3 + $0x20] sm:$0xff] %vm99, %v88
  %105 = vst.msk [vmem:[%s3 + $0x28] sm:$0xff] %vm99, %v91
  %106 = vst.msk [vmem:[%s3 + $0x30] sm:$0xff] %vm99, %v94
  %107 = vst.msk [vmem:[%s3 + $0x38] sm:$0xff] %vm99, %v97
  %vm108 = vcmp.gt.f32.partialorder %v76, 20.0
  %vm109 = vcmp.gt.f32.partialorder %v79, 20.0
  %vm110 = vcmp.gt.f32.partialorder %v82, 20.0
  %vm111 = vcmp.gt.f32.partialorder %v85, 20.0
  %vm112 = vcmp.gt.f32.partialorder %v88, 20.0
  %vm113 = vcmp.gt.f32.partialorder %v91, 20.0
  %vm114 = vcmp.gt.f32.partialorder %v94, 20.0
  %vm115 = vcmp.gt.f32.partialorder %v97, 20.0
  %v116 = vsel %vm108, 0.0, %v76
  %v117 = vsel %vm109, 0.0, %v79
  %v118 = vsel %vm110, 0.0, %v82
  %v119 = vsel %vm111, 0.0, %v85
  %v120 = vsel %vm112, 0.0, %v88
  %v121 = vsel %vm113, 0.0, %v91
  %v122 = vsel %vm114, 0.0, %v94
  %v123 = vsel %vm115, 0.0, %v97
  %v124 = vmul.f32 %v116, 1.442695
  %v125 = vpow.pop %v124
  %v126 = vmul.f32 %v117, 1.442695
  %v127 = vpow.pop %v126
  %v128 = vmul.f32 %v118, 1.442695
  %v129 = vpow.pop %v128
  %v130 = vmul.f32 %v119, 1.442695
  %v131 = vpow.pop %v130
  %v132 = vmul.f32 %v120, 1.442695
  %v133 = vpow.pop %v132
  %v134 = vmul.f32 %v121, 1.442695
  %v135 = vpow.pop %v134
  %v136 = vmul.f32 %v122, 1.442695
  %v137 = vpow.pop %v136
  %v138 = vmul.f32 %v123, 1.442695
  %v139 = vpow.pop %v138
  %v140 = vadd.f32 %v125, 1.0
  %v141 = vlog2.pop %v140
  %v142 = vmul.f32 %v141, 0.6931472
  %v143 = vmul.f32 -0.5, %v125
  %v144 = vadd.f32 %v143, 1.0
  %v145 = vmul.f32 %v144, %v125
  %v146 = vand.u32 2147483647, %v125
  %vm147 = vcmp.lt.f32.partialorder %v146, 0.0004427343
  %v148 = vsel %vm147, %v145, %v142
  %v149 = vadd.f32 %v127, 1.0
  %v150 = vlog2.pop %v149
  %v151 = vmul.f32 %v150, 0.6931472
  %v152 = vmul.f32 -0.5, %v127
  %v153 = vadd.f32 %v152, 1.0
  %v154 = vmul.f32 %v153, %v127
  %v155 = vand.u32 2147483647, %v127
  %vm156 = vcmp.lt.f32.partialorder %v155, 0.0004427343
  %v157 = vsel %vm156, %v154, %v151
  %v158 = vadd.f32 %v129, 1.0
  %v159 = vlog2.pop %v158
  %v160 = vmul.f32 %v159, 0.6931472
  %v161 = vmul.f32 -0.5, %v129
  %v162 = vadd.f32 %v161, 1.0
  %v163 = vmul.f32 %v162, %v129
  %v164 = vand.u32 2147483647, %v129
  %vm165 = vcmp.lt.f32.partialorder %v164, 0.0004427343
  %v166 = vsel %vm165, %v163, %v160
  %v167 = vadd.f32 %v131, 1.0
  %v168 = vlog2.pop %v167
  %v169 = vmul.f32 %v168, 0.6931472
  %v170 = vmul.f32 -0.5, %v131
  %v171 = vadd.f32 %v170, 1.0
  %v172 = vmul.f32 %v171, %v131
  %v173 = vand.u32 2147483647, %v131
  %vm174 = vcmp.lt.f32.partialorder %v173, 0.0004427343
  %v175 = vsel %vm174, %v172, %v169
  %v176 = vadd.f32 %v133, 1.0
  %v177 = vlog2.pop %v176
  %v178 = vmul.f32 %v177, 0.6931472
  %v179 = vmul.f32 -0.5, %v133
  %v180 = vadd.f32 %v179, 1.0
  %v181 = vmul.f32 %v180, %v133
  %v182 = vand.u32 2147483647, %v133
  %vm183 = vcmp.lt.f32.partialorder %v182, 0.0004427343
  %v184 = vsel %vm183, %v181, %v178
  %v185 = vadd.f32 %v135, 1.0
  %v186 = vlog2.pop %v185
  %v187 = vmul.f32 %v186, 0.6931472
  %v188 = vmul.f32 -0.5, %v135
  %v189 = vadd.f32 %v188, 1.0
  %v190 = vmul.f32 %v189, %v135
  %v191 = vand.u32 2147483647, %v135
  %vm192 = vcmp.lt.f32.partialorder %v191, 0.0004427343
  %v193 = vsel %vm192, %v190, %v187
  %v194 = vadd.f32 %v137, 1.0
  %v195 = vlog2.pop %v194
  %v196 = vmul.f32 %v195, 0.6931472
  %v197 = vmul.f32 -0.5, %v137
  %v198 = vadd.f32 %v197, 1.0
  %v199 = vmul.f32 %v198, %v137
  %v200 = vand.u32 2147483647, %v137
  %vm201 = vcmp.lt.f32.partialorder %v200, 0.0004427343
  %v202 = vsel %vm201, %v199, %v196
  %v203 = vadd.f32 %v139, 1.0
  %v204 = vlog2.pop %v203
  %v205 = vmul.f32 %v204, 0.6931472
  %v206 = vmul.f32 -0.5, %v139
  %v207 = vadd.f32 %v206, 1.0
  %v208 = vmul.f32 %v207, %v139
  %v209 = vand.u32 2147483647, %v139
  %vm210 = vcmp.lt.f32.partialorder %v209, 0.0004427343
  %v211 = vsel %vm210, %v208, %v205
  %v212 = vsel %vm108, %v76, %v148
  %v213 = vsel %vm109, %v79, %v157
  %v214 = vsel %vm110, %v82, %v166
  %v215 = vsel %vm111, %v85, %v175
  %v216 = vsel %vm112, %v88, %v184
  %v217 = vsel %vm113, %v91, %v193
  %v218 = vsel %vm114, %v94, %v202
  %v219 = vsel %vm115, %v97, %v211
  %228 = vrot.lane.b32.xlu0 %v212, 112
  %v229 = vpop.permute.xlu0 %228
  %230 = vrot.lane.b32.xlu0 %v213, 112
  %v231 = vpop.permute.xlu0 %230
  %232 = vrot.lane.b32.xlu0 %v214, 112
  %v233 = vpop.permute.xlu0 %232
  %234 = vrot.lane.b32.xlu0 %v215, 112
  %v235 = vpop.permute.xlu0 %234
  %236 = vrot.lane.b32.xlu0 %v216, 112
  %v237 = vpop.permute.xlu0 %236
  %238 = vrot.lane.b32.xlu0 %v217, 112
  %v239 = vpop.permute.xlu0 %238
  %240 = vrot.lane.b32.xlu0 %v218, 112
  %v241 = vpop.permute.xlu0 %240
  %242 = vrot.lane.b32.xlu0 %v219, 112
  %v243 = vpop.permute.xlu0 %242
  %252 = vst.msk [vmem:[%s4] sm:$0xff] %vm99, %v229
  %253 = vst.msk [vmem:[%s4 + $0x8] sm:$0xff] %vm99, %v231
  %254 = vst.msk [vmem:[%s4 + $0x10] sm:$0xff] %vm99, %v233
  %255 = vst.msk [vmem:[%s4 + $0x18] sm:$0xff] %vm99, %v235
  %256 = vst.msk [vmem:[%s4 + $0x20] sm:$0xff] %vm99, %v237
  %257 = vst.msk [vmem:[%s4 + $0x28] sm:$0xff] %vm99, %v239
  %258 = vst.msk [vmem:[%s4 + $0x30] sm:$0xff] %vm99, %v241
  %259 = vst.msk [vmem:[%s4 + $0x38] sm:$0xff] %vm99, %v243
  %v260 = vadd.f32 %v212, 1.0
  %v261 = vadd.f32 %v213, 1.0
  %v262 = vadd.f32 %v214, 1.0
  %v263 = vadd.f32 %v215, 1.0
  %v264 = vadd.f32 %v216, 1.0
  %v265 = vadd.f32 %v217, 1.0
  %v266 = vadd.f32 %v218, 1.0
  %v267 = vadd.f32 %v219, 1.0
  %276 = vrot.lane.b32.xlu0 %v260, 96
  %v277 = vpop.permute.xlu0 %276
  %278 = vrot.lane.b32.xlu0 %v261, 96
  %v279 = vpop.permute.xlu0 %278
  %280 = vrot.lane.b32.xlu0 %v262, 96
  %v281 = vpop.permute.xlu0 %280
  %282 = vrot.lane.b32.xlu0 %v263, 96
  %v283 = vpop.permute.xlu0 %282
  %284 = vrot.lane.b32.xlu0 %v264, 96
  %v285 = vpop.permute.xlu0 %284
  %286 = vrot.lane.b32.xlu0 %v265, 96
  %v287 = vpop.permute.xlu0 %286
  %288 = vrot.lane.b32.xlu0 %v266, 96
  %v289 = vpop.permute.xlu0 %288
  %290 = vrot.lane.b32.xlu0 %v267, 96
  %v291 = vpop.permute.xlu0 %290
  %300 = vst.msk [vmem:[%s5] sm:$0xff] %vm99, %v277
  %301 = vst.msk [vmem:[%s5 + $0x8] sm:$0xff] %vm99, %v279
  %302 = vst.msk [vmem:[%s5 + $0x10] sm:$0xff] %vm99, %v281
  %303 = vst.msk [vmem:[%s5 + $0x18] sm:$0xff] %vm99, %v283
  %304 = vst.msk [vmem:[%s5 + $0x20] sm:$0xff] %vm99, %v285
  %305 = vst.msk [vmem:[%s5 + $0x28] sm:$0xff] %vm99, %v287
  %306 = vst.msk [vmem:[%s5 + $0x30] sm:$0xff] %vm99, %v289
  %307 = vst.msk [vmem:[%s5 + $0x38] sm:$0xff] %vm99, %v291
  // Predicated region
  $region14: #{studentt_head.1} parent=0 // pred_check
    _
  $region15: #{studentt_head.1} parent=0 // pred_check_branch
    %309 = sbr.rel (0) target = $region17
  $region16: #{studentt_head.1} parent=0 // pred_region
    _
  $region17: #{studentt_head.1} parent=0 // pred_fallthru
    _
  // Predicated region
  $region18: #{studentt_head.1} parent=0 // pred_check
    _
  $region19: #{studentt_head.1} parent=0 // pred_check_branch
    %311 = sbr.rel (0) target = $region21
  $region20: #{studentt_head.1} parent=0 // pred_region
    _
  $region21: #{studentt_head.1} parent=0 // pred_fallthru
    _
  // Predicated region
  $region22: #{studentt_head.1} parent=0 // pred_check
    _
  $region23: #{studentt_head.1} parent=0 // pred_check_branch
    %313 = sbr.rel (0) target = $region25
  $region24: #{studentt_head.1} parent=0 // pred_region
    _
  $region25: #{studentt_head.1} parent=0 // pred_fallthru
    _
  // Predicated region
  $region26: #{studentt_head.1} parent=0 // pred_check
    _
  $region27: #{studentt_head.1} parent=0 // pred_check_branch
    %315 = sbr.rel (0) target = $region29
  $region28: #{studentt_head.1} parent=0 // pred_region
    _
  $region29: #{studentt_head.1} parent=0 // pred_fallthru
    _
  // Predicated region
  $region30: #{studentt_head.1} parent=0 // pred_check
    _
  $region31: #{studentt_head.1} parent=0 // pred_check_branch
    %317 = sbr.rel (0) target = $region33
  $region32: #{studentt_head.1} parent=0 // pred_region
    _
  $region33: #{studentt_head.1} parent=0 // pred_fallthru
    _
  // Predicated region
  $region34: #{studentt_head.1} parent=0 // pred_check
    _
  $region35: #{studentt_head.1} parent=0 // pred_check_branch
    %319 = sbr.rel (0) target = $region37
  $region36: #{studentt_head.1} parent=0 // pred_region
    _
  $region37: #{studentt_head.1} parent=0 // pred_fallthru
    _

</llo_original>
